<compile_context>
chip_gen: v6e
topology: v6e:2x2x1
jax: 0.10.0
libtpu: 0.0.40
codegen_flags: <defaults>
</compile_context>

<pallas_src>
import math
from functools import partial

import jax
import jax.numpy as jnp
from jax import lax
from jax.experimental import pallas as pl
from jax.experimental.pallas import tpu as pltpu

EMBEDDING_DIM = 128  # matches the module's `embedding_dim = 128`


def _attention_kernel(x_ref, wqkv_ref, o_ref, *, batch, seq_len, dim,
                      inv_sqrt_dk, compute_dtype):
    # x_ref:    (B*S, D)  all batch rows flattened into the MXU row dim.
    # wqkv_ref: (D, 3D)   fused [w_query | w_key | w_value].
    # o_ref:    (B*S, D)  lane-dense output (D = 128 multiple -> unmasked vst).
    x = x_ref[...].astype(compute_dtype)
    w = wqkv_ref[...].astype(compute_dtype)

    # Single fused projection for every batch row at once: one (B*S, D)x(D, 3D)
    # MXU matmul, f32 accumulation.
    qkv = jnp.dot(x, w, preferred_element_type=jnp.float32)      # (B*S, 3D) f32

    # Lane-aligned slices at multiples of 128 -> no layout copies.
    q = qkv[:, :dim]
    k = qkv[:, dim:2 * dim]
    v = qkv[:, 2 * dim:]

    # Per-batch attention.  `batch` is a Python int (static unroll of 2).
    for b in range(batch):
        lo, hi = b * seq_len, (b + 1) * seq_len                  # sublane-aligned
        qb = q[lo:hi].astype(compute_dtype)
        kb = k[lo:hi].astype(compute_dtype)
        vb = v[lo:hi].astype(compute_dtype)

        # scores = q @ k^T, contracting the last dims directly on the MXU.
        scores = lax.dot_general(
            qb, kb,
            dimension_numbers=(((1,), (1,)), ((), ())),
            preferred_element_type=jnp.float32,
        )                                                         # (S, S) f32
        # Scale AFTER the matmul, same order as the reference (product / sqrt(dk)).
        scores = scores * inv_sqrt_dk

        # Softmax over the last axis (dim=2 in torch), applied to the UNMASKED
        # scaled scores -- exactly as the reference module does.  Exact divide
        # for the normalization (see correctness notes above).
        m = jnp.max(scores, axis=-1, keepdims=True)
        p = jnp.exp(scores - m)
        probs = p / jnp.sum(p, axis=-1, keepdims=True)

        # output = probs @ v, f32 accumulation.
        out = jnp.dot(probs.astype(compute_dtype), vb,
                      preferred_element_type=jnp.float32)          # (S, D)
        o_ref[lo:hi, :] = out.astype(o_ref.dtype)


def fuse_qkv_weights(w_query, w_key, w_value):
    """Fuse the three projection weights once (hoisted out of the forward path)."""
    return jnp.concatenate([w_query, w_key, w_value], axis=1)      # (D, 3D)


def attention_forward(x, token_attention_masks, w_qkv, *,
                      compute_dtype=jnp.float32):
    """x: (B, S, D) f32, token_attention_masks: (B, S) int -> (B, S, D) f32.

    `token_attention_masks` is accepted for signature parity with the PyTorch
    module but (faithfully to the reference forward) never applied.
    """
    B, S, D = x.shape
    assert D == EMBEDDING_DIM and D % 128 == 0
    assert S % 8 == 0, "S must be a multiple of the 8-row sublane tile"
    assert w_qkv.shape == (D, 3 * D)
    del token_attention_masks  # dead in the reference forward as well

    # Whole working set (x, w_qkv, qkv, scores, out) is well under 1 MiB at
    # these sizes -> single VMEM-resident invocation, no grid, no pipelining.
    vmem_est = 4 * (B * S * D + D * 3 * D + B * S * 3 * D + B * S * S + B * S * D)
    assert vmem_est < 16 * 1024 * 1024, (
        "working set no longer fits a single VMEM block comfortably; "
        "add flash-style KV tiling before growing S/B this large")

    # Flatten batch into the MXU row dimension (free reshape in XLA).
    x2d = x.reshape(B * S, D)

    kernel = partial(
        _attention_kernel,
        batch=B, seq_len=S, dim=D,
        inv_sqrt_dk=1.0 / math.sqrt(D),
        compute_dtype=compute_dtype,
    )

    out2d = pl.pallas_call(
        kernel,
        out_shape=jax.ShapeDtypeStruct((B * S, D), jnp.float32),
        in_specs=[
            pl.BlockSpec(memory_space=pltpu.MemorySpace.VMEM),   # x (whole array)
            pl.BlockSpec(memory_space=pltpu.MemorySpace.VMEM),   # fused QKV weights
        ],
        out_specs=pl.BlockSpec(memory_space=pltpu.MemorySpace.VMEM),
    )(x2d, w_qkv)

    return out2d.reshape(B, S, D)


def _reference_jax(x, token_attention_masks, w_query, w_key, w_value):
    """Pure-JAX reference mirroring the PyTorch forward, at HIGHEST precision."""
    hp = lax.Precision.HIGHEST
    q = jnp.matmul(x, w_query, precision=hp)
    k = jnp.matmul(x, w_key, precision=hp)
    v = jnp.matmul(x, w_value, precision=hp)
    product = jnp.einsum("bqd,bkd->bqk", q, k, precision=hp)
    scale = product / math.sqrt(k.shape[2])
    # mask computed but unused (faithful to the reference)
    _ = jnp.where(token_attention_masks == 0, -1000, 0)[:, None, :]
    probs = jax.nn.softmax(scale, axis=2)
    return jnp.einsum("bqk,bkd->bqd", probs, v, precision=hp)


if __name__ == "__main__":
    key = jax.random.PRNGKey(0)
    k_x, k_q, k_k, k_v = jax.random.split(key, 4)

    B, S, D = 2, 16, EMBEDDING_DIM  # small batch / seq, embedding fixed at 128

    # Embedding-scale activations: keeps softmax logits O(1) so the f32
    # kernel-vs-reference parity check is well conditioned (U[0,1) weights
    # with unit-normal x drive logits to ~+-400 and a chaotic near-one-hot
    # softmax, which stresses the test data, not the kernel).
    x = 0.1 * jax.random.normal(k_x, (B, S, D), dtype=jnp.float32)

    # token_attention_masks: 1 = real token, 0 = padding (like BERT masks).
    token_attention_masks = jnp.concatenate(
        [jnp.ones((B, S - 4), dtype=jnp.int32),
         jnp.zeros((B, 4), dtype=jnp.int32)],
        axis=1,
    )

    # torch.rand(D, D) -> uniform [0, 1); deterministic equivalents here.
    w_query = jax.random.uniform(k_q, (D, D), dtype=jnp.float32)
    w_key = jax.random.uniform(k_k, (D, D), dtype=jnp.float32)
    w_value = jax.random.uniform(k_v, (D, D), dtype=jnp.float32)

    # Weight fusion hoisted: computed once, reused by every forward call.
    w_qkv = fuse_qkv_weights(w_query, w_key, w_value)

    forward = jax.jit(attention_forward)
    out = jax.block_until_ready(forward(x, token_attention_masks, w_qkv))

    ref = jax.block_until_ready(
        _reference_jax(x, token_attention_masks, w_query, w_key, w_value))

    assert out.shape == (B, S, D)
    assert jnp.allclose(out, ref, atol=2e-3, rtol=2e-3), (
        f"mismatch vs reference: max|diff|={float(jnp.max(jnp.abs(out - ref)))}")

    print("KERNEL_OK")
</pallas_src>

<mosaic_0001>
module attributes {stable_mosaic.version = 11 : i64} {
  func.func @_attention_kernel(%arg0: memref<32x128xf32, #tpu.memory_space<vmem>>, %arg1: memref<128x384xf32, #tpu.memory_space<vmem>>, %arg2: memref<32x128xf32, #tpu.memory_space<vmem>>) attributes {dimension_semantics = [], scalar_prefetch = 0 : i64, scratch_operands = 0 : i64, tpu.core_type = #tpu.core_type<tc>} {
    %c0 = arith.constant 0 : index
    %c0_0 = arith.constant 0 : index
    %0 = vector.load %arg0[%c0, %c0_0] : memref<32x128xf32, #tpu.memory_space<vmem>>, vector<32x128xf32>
    %c0_1 = arith.constant 0 : index
    %c0_2 = arith.constant 0 : index
    %1 = vector.load %arg1[%c0_1, %c0_2] : memref<128x384xf32, #tpu.memory_space<vmem>>, vector<128x384xf32>
    %cst = arith.constant dense<0.000000e+00> : vector<32x384xf32>
    %2 = tpu.matmul %0, %1, %cst {dimension_numbers = #tpu.dot_dimension_numbers<[1], [0], [0], [1], [0, 0, 1, 1], [], []>} : vector<32x128xf32>, vector<128x384xf32>, vector<32x384xf32> -> vector<32x384xf32>
    %3 = vector.extract_strided_slice %2 {offsets = [0, 0], sizes = [32, 128], strides = [1, 1]} : vector<32x384xf32> to vector<32x128xf32>
    %4 = vector.extract_strided_slice %2 {offsets = [0, 128], sizes = [32, 128], strides = [1, 1]} : vector<32x384xf32> to vector<32x128xf32>
    %5 = vector.extract_strided_slice %2 {offsets = [0, 256], sizes = [32, 128], strides = [1, 1]} : vector<32x384xf32> to vector<32x128xf32>
    %6 = vector.extract_strided_slice %3 {offsets = [0, 0], sizes = [16, 128], strides = [1, 1]} : vector<32x128xf32> to vector<16x128xf32>
    %7 = vector.extract_strided_slice %4 {offsets = [0, 0], sizes = [16, 128], strides = [1, 1]} : vector<32x128xf32> to vector<16x128xf32>
    %8 = vector.extract_strided_slice %5 {offsets = [0, 0], sizes = [16, 128], strides = [1, 1]} : vector<32x128xf32> to vector<16x128xf32>
    %cst_3 = arith.constant dense<0.000000e+00> : vector<16x16xf32>
    %9 = tpu.matmul %6, %7, %cst_3 {dimension_numbers = #tpu.dot_dimension_numbers<[1], [1], [0], [0], [0, 0, 1, 0], [], []>} : vector<16x128xf32>, vector<16x128xf32>, vector<16x16xf32> -> vector<16x16xf32>
    %cst_4 = arith.constant 0.0883883461 : f32
    %10 = vector.broadcast %cst_4 : f32 to vector<16x16xf32>
    %11 = arith.mulf %9, %10 : vector<16x16xf32>
    %cst_5 = arith.constant dense<0xFF800000> : vector<16xf32>
    %12 = vector.multi_reduction <maximumf>, %11, %cst_5 [1] : vector<16x16xf32> to vector<16xf32>
    %13 = vector.shape_cast %12 : vector<16xf32> to vector<16x1xf32>
    %14 = vector.broadcast %13 : vector<16x1xf32> to vector<16x16xf32>
    %15 = arith.subf %11, %14 : vector<16x16xf32>
    %16 = math.exp %15 : vector<16x16xf32>
    %cst_6 = arith.constant dense<0.000000e+00> : vector<16xf32>
    %17 = vector.multi_reduction <add>, %16, %cst_6 [1] : vector<16x16xf32> to vector<16xf32>
    %18 = vector.shape_cast %17 : vector<16xf32> to vector<16x1xf32>
    %19 = vector.broadcast %18 : vector<16x1xf32> to vector<16x16xf32>
    %20 = arith.divf %16, %19 : vector<16x16xf32>
    %cst_7 = arith.constant dense<0.000000e+00> : vector<16x128xf32>
    %21 = tpu.matmul %20, %8, %cst_7 {dimension_numbers = #tpu.dot_dimension_numbers<[1], [0], [0], [1], [0, 0, 1, 1], [], []>} : vector<16x16xf32>, vector<16x128xf32>, vector<16x128xf32> -> vector<16x128xf32>
    %c0_8 = arith.constant 0 : index
    %c0_9 = arith.constant 0 : index
    %22 = vector.load %arg2[%c0_8, %c0_9] : memref<32x128xf32, #tpu.memory_space<vmem>>, vector<16x128xf32>
    tpu.vector_store %arg2[%c0_8, %c0_9], %21 {strides = array<i32>} : memref<32x128xf32, #tpu.memory_space<vmem>>, vector<16x128xf32>,
    %23 = vector.extract_strided_slice %3 {offsets = [16, 0], sizes = [16, 128], strides = [1, 1]} : vector<32x128xf32> to vector<16x128xf32>
    %24 = vector.extract_strided_slice %4 {offsets = [16, 0], sizes = [16, 128], strides = [1, 1]} : vector<32x128xf32> to vector<16x128xf32>
    %25 = vector.extract_strided_slice %5 {offsets = [16, 0], sizes = [16, 128], strides = [1, 1]} : vector<32x128xf32> to vector<16x128xf32>
    %cst_10 = arith.constant dense<0.000000e+00> : vector<16x16xf32>
    %26 = tpu.matmul %23, %24, %cst_10 {dimension_numbers = #tpu.dot_dimension_numbers<[1], [1], [0], [0], [0, 0, 1, 0], [], []>} : vector<16x128xf32>, vector<16x128xf32>, vector<16x16xf32> -> vector<16x16xf32>
    %cst_11 = arith.constant 0.0883883461 : f32
    %27 = vector.broadcast %cst_11 : f32 to vector<16x16xf32>
    %28 = arith.mulf %26, %27 : vector<16x16xf32>
    %cst_12 = arith.constant dense<0xFF800000> : vector<16xf32>
    %29 = vector.multi_reduction <maximumf>, %28, %cst_12 [1] : vector<16x16xf32> to vector<16xf32>
    %30 = vector.shape_cast %29 : vector<16xf32> to vector<16x1xf32>
    %31 = vector.broadcast %30 : vector<16x1xf32> to vector<16x16xf32>
    %32 = arith.subf %28, %31 : vector<16x16xf32>
    %33 = math.exp %32 : vector<16x16xf32>
    %cst_13 = arith.constant dense<0.000000e+00> : vector<16xf32>
    %34 = vector.multi_reduction <add>, %33, %cst_13 [1] : vector<16x16xf32> to vector<16xf32>
    %35 = vector.shape_cast %34 : vector<16xf32> to vector<16x1xf32>
    %36 = vector.broadcast %35 : vector<16x1xf32> to vector<16x16xf32>
    %37 = arith.divf %33, %36 : vector<16x16xf32>
    %cst_14 = arith.constant dense<0.000000e+00> : vector<16x128xf32>
    %38 = tpu.matmul %37, %25, %cst_14 {dimension_numbers = #tpu.dot_dimension_numbers<[1], [0], [0], [1], [0, 0, 1, 1], [], []>} : vector<16x16xf32>, vector<16x128xf32>, vector<16x128xf32> -> vector<16x128xf32>
    %c16 = arith.constant 16 : index
    %c0_15 = arith.constant 0 : index
    %39 = vector.load %arg2[%c16, %c0_15] : memref<32x128xf32, #tpu.memory_space<vmem>>, vector<16x128xf32>
    tpu.vector_store %arg2[%c16, %c0_15], %38 {strides = array<i32>} : memref<32x128xf32, #tpu.memory_space<vmem>>, vector<16x128xf32>,
    return
  }
}

</mosaic_0001>

<llo_original>
// kernel: attention_forward.1
$region0: #{attention_forward.1}
  #allocation0 [shape = 'u32[]', space=smem, size = 0x4, offset = 0x4, fixed_abs, tag = 'smem constant byte address 0x4 - core index']
  #allocation1 [shape = 'u32[144,128]{1,0:T(1,128)}', space=vmem, size = 0x12000, scoped, tag = 'internal scratch']
  %s0 = inlined_call_operand.hbm [shape: f32[32,128], index: 0, kind: input, shape index: {}]
  %s1 = inlined_call_operand.hbm [shape: f32[128,384], index: 1, kind: input, shape index: {}]
  %s2 = inlined_call_operand.hbm [shape: f32[32,128], index: 2, kind: output, shape index: {}]
  %s3 = sld [smem:[#allocation0]]
  $region26: #{attention_forward.1} parent=0
    _
  %s5 = ssub.s32 1, %s3
  %s6 = scalar_select 0, %s5, %s3
  $region1: #{attention_forward.1} parent=0
    #allocation2 [shape = 'u8[16384]{0}', space=vmem, size = 0x4000, scoped, tag = 'input window, operand 0, single buffered']
    #allocation3 [shape = 's32[1]{0}', space=sflag, size = 0x4, scoped, tag = 'scoped memory for attention_forward.1']
    #allocation4 [shape = 's32[1]{0}', space=sflag, size = 0x4, scoped, tag = 'scoped memory for attention_forward.1']
    #allocation5 [shape = 'u8[196608]{0}', space=vmem, size = 0x30000, scoped, tag = 'input window, operand 1, single buffered']
    #allocation6 [shape = 's32[1]{0}', space=sflag, size = 0x4, scoped, tag = 'scoped memory for attention_forward.1']
    #allocation7 [shape = 'u8[16384]{0}', space=vmem, size = 0x4000, scoped, tag = 'output window, operand 0, single buffered']
    %7 = vsyncpa [#allocation3], 0
    %8 = vsyncpa [#allocation6], 0
    %9 = vsyncpa [#allocation4], 0
    // Predicated region
    $region2: #{attention_forward.1} parent=1 // pred_check
      _
    $region3: #{attention_forward.1} parent=1 // pred_check_branch
      %11 = sbr.rel (0) target = $region5
    $region4: #{attention_forward.1} parent=1 // pred_region
      %s13 = ssub.s32 512, 512
      %14 = vsyncadd [#allocation3], %s13
      %s15 = sshll.u32 [#allocation2], 4
      %s16 = int_to_ptr.vmem [resolvable:$true] %s15
      %21 = dma.hbm_to_vmem [thread:$0]  %s0, 512, %s16, [#allocation3], 128, 128, 8
    $region5: #{attention_forward.1} parent=1 // pred_fallthru
      _
    // Predicated region
    $region6: #{attention_forward.1} parent=1 // pred_check
      _
    $region7: #{attention_forward.1} parent=1 // pred_check_branch
      %23 = sbr.rel (0) target = $region9
    $region8: #{attention_forward.1} parent=1 // pred_region
      %s25 = ssub.s32 6144, 6144
      %26 = vsyncadd [#allocation6], %s25
      %s27 = sshll.u32 [#allocation5], 4
      %s28 = int_to_ptr.vmem [resolvable:$true] %s27
      %33 = dma.hbm_to_vmem [thread:$0]  %s1, 6144, %s28, [#allocation6], 384, 384, 24
    $region9: #{attention_forward.1} parent=1 // pred_fallthru
      _
    // Predicated region
    $region10: #{attention_forward.1} parent=1 // pred_check
      _
    $region11: #{attention_forward.1} parent=1 // pred_check_branch
      %35 = sbr.rel (0) target = $region13
    $region12: #{attention_forward.1} parent=1 // pred_region
      %36 = dma.done [#allocation3], 512
    $region13: #{attention_forward.1} parent=1 // pred_fallthru
      _
    // Predicated region
    $region14: #{attention_forward.1} parent=1 // pred_check
      _
    $region15: #{attention_forward.1} parent=1 // pred_check_branch
      %38 = sbr.rel (0) target = $region17
    $region16: #{attention_forward.1} parent=1 // pred_region
      %39 = dma.done [#allocation6], 6144
    $region17: #{attention_forward.1} parent=1 // pred_fallthru
      _
    %v40 = vld [vmem:[#allocation2] sm:$0xff]
    %v41 = vld [vmem:[#allocation2 + $0x8] sm:$0xff]
    %v42 = vld [vmem:[#allocation2 + $0x10] sm:$0xff]
    %v43 = vld [vmem:[#allocation2 + $0x18] sm:$0xff]
    %v44 = vld [vmem:[#allocation5] sm:$0xff]
    %v45 = vld [vmem:[#allocation5 + $0x8] sm:$0xff]
    %v46 = vld [vmem:[#allocation5 + $0x10] sm:$0xff]
    %v47 = vld [vmem:[#allocation5 + $0x18] sm:$0xff]
    %v48 = vld [vmem:[#allocation5 + $0x20] sm:$0xff]
    %v49 = vld [vmem:[#allocation5 + $0x28] sm:$0xff]
    %v50 = vld [vmem:[#allocation5 + $0x30] sm:$0xff]
    %v51 = vld [vmem:[#allocation5 + $0x38] sm:$0xff]
    %v52 = vld [vmem:[#allocation5 + $0x40] sm:$0xff]
    %v53 = vld [vmem:[#allocation5 + $0x48] sm:$0xff]
    %v54 = vld [vmem:[#allocation5 + $0x50] sm:$0xff]
    %v55 = vld [vmem:[#allocation5 + $0x58] sm:$0xff]
    %v56 = vld [vmem:[#allocation5 + $0x60] sm:$0xff]
    %v57 = vld [vmem:[#allocation5 + $0x68] sm:$0xff]
    %v58 = vld [vmem:[#allocation5 + $0x70] sm:$0xff]
    %v59 = vld [vmem:[#allocation5 + $0x78] sm:$0xff]
    %v60 = vld [vmem:[#allocation5 + $0x80] sm:$0xff]
    %v61 = vld [vmem:[#allocation5 + $0x88] sm:$0xff]
    %v62 = vld [vmem:[#allocation5 + $0x90] sm:$0xff]
    %v63 = vld [vmem:[#allocation5 + $0x98] sm:$0xff]
    %v64 = vld [vmem:[#allocation5 + $0xa0] sm:$0xff]
    %v65 = vld [vmem:[#allocation5 + $0xa8] sm:$0xff]
    %v66 = vld [vmem:[#allocation5 + $0xb0] sm:$0xff]
    %v67 = vld [vmem:[#allocation5 + $0xb8] sm:$0xff]
    %v68 = vld [vmem:[#allocation5 + $0xc0] sm:$0xff]
    %v69 = vld [vmem:[#allocation5 + $0xc8] sm:$0xff]
    %v70 = vld [vmem:[#allocation5 + $0xd0] sm:$0xff]
    %v71 = vld [vmem:[#allocation5 + $0xd8] sm:$0xff]
    %v72 = vld [vmem:[#allocation5 + $0xe0] sm:$0xff]
    %v73 = vld [vmem:[#allocation5 + $0xe8] sm:$0xff]
    %v74 = vld [vmem:[#allocation5 + $0xf0] sm:$0xff]
    %v75 = vld [vmem:[#allocation5 + $0xf8] sm:$0xff]
    %v76 = vld [vmem:[#allocation5 + $0x100] sm:$0xff]
    %v77 = vld [vmem:[#allocation5 + $0x108] sm:$0xff]
    %v78 = vld [vmem:[#allocation5 + $0x110] sm:$0xff]
    %v79 = vld [vmem:[#allocation5 + $0x118] sm:$0xff]
    %v80 = vld [vmem:[#allocation5 + $0x120] sm:$0xff]
    %v81 = vld [vmem:[#allocation5 + $0x128] sm:$0xff]
    %v82 = vld [vmem:[#allocation5 + $0x130] sm:$0xff]
    %v83 = vld [vmem:[#allocation5 + $0x138] sm:$0xff]
    %v84 = vld [vmem:[#allocation5 + $0x140] sm:$0xff]
    %v85 = vld [vmem:[#allocation5 + $0x148] sm:$0xff]
    %v86 = vld [vmem:[#allocation5 + $0x150] sm:$0xff]
    %v87 = vld [vmem:[#allocation5 + $0x158] sm:$0xff]
    %v88 = vld [vmem:[#allocation5 + $0x160] sm:$0xff]
    %v89 = vld [vmem:[#allocation5 + $0x168] sm:$0xff]
    %v90 = vld [vmem:[#allocation5 + $0x170] sm:$0xff]
    %v91 = vld [vmem:[#allocation5 + $0x178] sm:$0xff]
    %92 = vmatprep.subr.mxu0 %v90
    %93 = vmatpush1.msra.mxu0 %v89
    %94 = vmatprep.subr.mxu0 %v87
    %95 = vmatpush1.msra.mxu0 %v86
    %96 = vmatprep.subr.mxu0 %v84
    %97 = vmatpush1.msra.mxu0 %v83
    %98 = vmatprep.subr.mxu0 %v81
    %99 = vmatpush1.msra.mxu0 %v80
    %100 = vmatprep.subr.mxu0 %v78
    %101 = vmatpush1.msra.mxu0 %v77
    %102 = vmatprep.subr.mxu0 %v75
    %103 = vmatpush1.msra.mxu0 %v74
    %104 = vmatprep.subr.mxu0 %v72
    %105 = vmatpush1.msra.mxu0 %v71
    %106 = vmatprep.subr.mxu0 %v69
    %107 = vmatpush1.msra.mxu0 %v68
    %108 = vmatprep.subr.mxu0 %v66
    %109 = vmatpush1.msra.mxu0 %v65
    %110 = vmatprep.subr.mxu0 %v63
    %111 = vmatpush1.msra.mxu0 %v62
    %112 = vmatprep.subr.mxu0 %v60
    %113 = vmatpush1.msra.mxu0 %v59
    %114 = vmatprep.subr.mxu0 %v57
    %115 = vmatpush1.msra.mxu0 %v56
    %116 = vmatprep.subr.mxu0 %v54
    %117 = vmatpush1.msra.mxu0 %v53
    %118 = vmatprep.subr.mxu0 %v51
    %119 = vmatpush1.msra.mxu0 %v50
    %120 = vmatprep.subr.mxu0 %v48
    %121 = vmatpush1.msra.mxu0 %v47
    %122 = vmatprep.subr.mxu0 %v45
    %123 = vmatpush1.msra.mxu0 %v44
    %124 = vmatprep.subr.mxu0 0.0
    %125 = vmatpush2.msra.mxu0 0.0
    %126 = vmatprep.subr.mxu0 0.0
    %127 = vmatpush2.msra.mxu0 0.0
    %128 = vmatprep.subr.mxu0 0.0
    %129 = vmatpush2.msra.mxu0 0.0
    %130 = vmatprep.subr.mxu0 0.0
    %131 = vmatpush2.msra.mxu0 0.0
    %132 = vmatprep.subr.mxu0 0.0
    %133 = vmatpush2.msra.mxu0 0.0
    %134 = vmatprep.subr.mxu0 0.0
    %135 = vmatpush2.msra.mxu0 0.0
    %136 = vmatprep.subr.mxu0 0.0
    %137 = vmatpush2.msra.mxu0 0.0
    %138 = vmatprep.subr.mxu0 0.0
    %139 = vmatpush2.msra.mxu0 0.0
    %140 = vmatprep.subr.mxu0 0.0
    %141 = vmatpush2.msra.mxu0 0.0
    %142 = vmatprep.subr.mxu0 0.0
    %143 = vmatpush2.msra.mxu0 0.0
    %144 = vmatprep.subr.mxu0 0.0
    %145 = vmatpush2.msra.mxu0 0.0
    %146 = vmatprep.subr.mxu0 0.0
    %147 = vmatpush2.msra.mxu0 0.0
    %148 = vmatprep.subr.mxu0 0.0
    %149 = vmatpush2.msra.mxu0 0.0
    %150 = vmatprep.subr.mxu0 0.0
    %151 = vmatpush2.msra.mxu0 0.0
    %152 = vmatprep.subr.mxu0 0.0
    %153 = vmatpush2.msra.mxu0 0.0
    %154 = vmatprep.subr.mxu0 0.0
    %155 = vmatpush2.msra.mxu0 0.0
    %156 = vmatprep.mubr.f32.mxu0 0.0
    %157 = vmatmul.mubr.f32.gmra.mxu0 %v40
    %v158 = vpop.f32.mrf.mxu0
    %v159 = vadd.f32 0.0, %v158
    %v160 = vpop.f32.mrf.mxu0
    %v161 = vadd.f32 0.0, %v160
    %162 = vmatprep.mubr.f32.mxu0 0.0
    %163 = vmatmul.mubr.f32.gmra.mxu0 %v41
    %v164 = vpop.f32.mrf.mxu0
    %v165 = vadd.f32 0.0, %v164
    %v166 = vpop.f32.mrf.mxu0
    %v167 = vadd.f32 0.0, %v166
    %168 = vmatprep.mubr.f32.mxu0 0.0
    %169 = vmatmul.mubr.f32.gmra.mxu0 %v42
    %v170 = vpop.f32.mrf.mxu0
    %v171 = vadd.f32 0.0, %v170
    %v172 = vpop.f32.mrf.mxu0
    %v173 = vadd.f32 0.0, %v172
    %174 = vmatprep.mubr.f32.mxu0 0.0
    %175 = vmatmul.mubr.f32.gmra.mxu0 %v43
    %v176 = vpop.f32.mrf.mxu0
    %v177 = vadd.f32 0.0, %v176
    %v178 = vpop.f32.mrf.mxu0
    %v179 = vadd.f32 0.0, %v178
    %180 = vdwg.mxu0
    %181 = vmatprep.subr.mxu0 0.0
    %182 = vmatpush1.msra.mxu0 %v91
    %183 = vmatprep.subr.mxu0 0.0
    %184 = vmatpush1.msra.mxu0 %v88
    %185 = vmatprep.subr.mxu0 0.0
    %186 = vmatpush1.msra.mxu0 %v85
    %187 = vmatprep.subr.mxu0 0.0
    %188 = vmatpush1.msra.mxu0 %v82
    %189 = vmatprep.subr.mxu0 0.0
    %190 = vmatpush1.msra.mxu0 %v79
    %191 = vmatprep.subr.mxu0 0.0
    %192 = vmatpush1.msra.mxu0 %v76
    %193 = vmatprep.subr.mxu0 0.0
    %194 = vmatpush1.msra.mxu0 %v73
    %195 = vmatprep.subr.mxu0 0.0
    %196 = vmatpush1.msra.mxu0 %v70
    %197 = vmatprep.subr.mxu0 0.0
    %198 = vmatpush1.msra.mxu0 %v67
    %199 = vmatprep.subr.mxu0 0.0
    %200 = vmatpush1.msra.mxu0 %v64
    %201 = vmatprep.subr.mxu0 0.0
    %202 = vmatpush1.msra.mxu0 %v61
    %203 = vmatprep.subr.mxu0 0.0
    %204 = vmatpush1.msra.mxu0 %v58
    %205 = vmatprep.subr.mxu0 0.0
    %206 = vmatpush1.msra.mxu0 %v55
    %207 = vmatprep.subr.mxu0 0.0
    %208 = vmatpush1.msra.mxu0 %v52
    %209 = vmatprep.subr.mxu0 0.0
    %210 = vmatpush1.msra.mxu0 %v49
    %211 = vmatprep.subr.mxu0 0.0
    %212 = vmatpush1.msra.mxu0 %v46
    %213 = vmatprep.subr.mxu0 0.0
    %214 = vmatpush2.msra.mxu0 0.0
    %215 = vmatprep.subr.mxu0 0.0
    %216 = vmatpush2.msra.mxu0 0.0
    %217 = vmatprep.subr.mxu0 0.0
    %218 = vmatpush2.msra.mxu0 0.0
    %219 = vmatprep.subr.mxu0 0.0
    %220 = vmatpush2.msra.mxu0 0.0
    %221 = vmatprep.subr.mxu0 0.0
    %222 = vmatpush2.msra.mxu0 0.0
    %223 = vmatprep.subr.mxu0 0.0
    %224 = vmatpush2.msra.mxu0 0.0
    %225 = vmatprep.subr.mxu0 0.0
    %226 = vmatpush2.msra.mxu0 0.0
    %227 = vmatprep.subr.mxu0 0.0
    %228 = vmatpush2.msra.mxu0 0.0
    %229 = vmatprep.subr.mxu0 0.0
    %230 = vmatpush2.msra.mxu0 0.0
    %231 = vmatprep.subr.mxu0 0.0
    %232 = vmatpush2.msra.mxu0 0.0
    %233 = vmatprep.subr.mxu0 0.0
    %234 = vmatpush2.msra.mxu0 0.0
    %235 = vmatprep.subr.mxu0 0.0
    %236 = vmatpush2.msra.mxu0 0.0
    %237 = vmatprep.subr.mxu0 0.0
    %238 = vmatpush2.msra.mxu0 0.0
    %239 = vmatprep.subr.mxu0 0.0
    %240 = vmatpush2.msra.mxu0 0.0
    %241 = vmatprep.subr.mxu0 0.0
    %242 = vmatpush2.msra.mxu0 0.0
    %243 = vmatprep.subr.mxu0 0.0
    %244 = vmatpush2.msra.mxu0 0.0
    %245 = vmatprep.mubr.f32.mxu0 0.0
    %246 = vmatmul.mubr.f32.gmra.mxu0 %v40
    %v247 = vpop.f32.mrf.mxu0
    %v248 = vadd.f32 0.0, %v247
    %v249 = vpop.f32.mrf.mxu0
    %250 = vmatprep.mubr.f32.mxu0 0.0
    %251 = vmatmul.mubr.f32.gmra.mxu0 %v41
    %v252 = vpop.f32.mrf.mxu0
    %v253 = vadd.f32 0.0, %v252
    %v254 = vpop.f32.mrf.mxu0
    %255 = vmatprep.mubr.f32.mxu0 0.0
    %256 = vmatmul.mubr.f32.gmra.mxu0 %v42
    %v257 = vpop.f32.mrf.mxu0
    %v258 = vadd.f32 0.0, %v257
    %v259 = vpop.f32.mrf.mxu0
    %260 = vmatprep.mubr.f32.mxu0 0.0
    %261 = vmatmul.mubr.f32.gmra.mxu0 %v43
    %v262 = vpop.f32.mrf.mxu0
    %v263 = vadd.f32 0.0, %v262
    %v264 = vpop.f32.mrf.mxu0
    %265 = vdwg.mxu0
    %266 = vmatprep.subr.mxu0 0.0
    %267 = vmatpush1.xpose.msra.mxu0 0.0
    %268 = vmatprep.subr.mxu0 0.0
    %269 = vmatpush1.xpose.msra.mxu0 0.0
    %270 = vmatprep.subr.mxu0 0.0
    %271 = vmatpush1.xpose.msra.mxu0 0.0
    %272 = vmatprep.subr.mxu0 0.0
    %273 = vmatpush1.xpose.msra.mxu0 0.0
    %274 = vmatprep.subr.mxu0 0.0
    %275 = vmatpush1.xpose.msra.mxu0 0.0
    %276 = vmatprep.subr.mxu0 0.0
    %277 = vmatpush1.xpose.msra.mxu0 0.0
    %278 = vmatprep.subr.mxu0 0.0
    %279 = vmatpush1.xpose.msra.mxu0 0.0
    %280 = vmatprep.subr.mxu0 0.0
    %281 = vmatpush1.xpose.msra.mxu0 0.0
    %282 = vmatprep.subr.mxu0 0.0
    %283 = vmatpush1.xpose.msra.mxu0 0.0
    %284 = vmatprep.subr.mxu0 0.0
    %285 = vmatpush1.xpose.msra.mxu0 0.0
    %286 = vmatprep.subr.mxu0 0.0
    %287 = vmatpush1.xpose.msra.mxu0 0.0
    %288 = vmatprep.subr.mxu0 0.0
    %289 = vmatpush1.xpose.msra.mxu0 0.0
    %290 = vmatprep.subr.mxu0 0.0
    %291 = vmatpush1.xpose.msra.mxu0 0.0
    %292 = vmatprep.subr.mxu0 0.0
    %293 = vmatpush1.xpose.msra.mxu0 0.0
    %294 = vmatprep.subr.mxu0 0.0
    %295 = vmatpush1.xpose.msra.mxu0 %v167
    %296 = vmatprep.subr.mxu0 0.0
    %297 = vmatpush1.xpose.msra.mxu0 %v161
    %298 = vmatprep.subr.mxu0 0.0
    %299 = vmatpush2.xpose.msra.mxu0 0.0
    %300 = vmatprep.subr.mxu0 0.0
    %301 = vmatpush2.xpose.msra.mxu0 0.0
    %302 = vmatprep.subr.mxu0 0.0
    %303 = vmatpush2.xpose.msra.mxu0 0.0
    %304 = vmatprep.subr.mxu0 0.0
    %305 = vmatpush2.xpose.msra.mxu0 0.0
    %306 = vmatprep.subr.mxu0 0.0
    %307 = vmatpush2.xpose.msra.mxu0 0.0
    %308 = vmatprep.subr.mxu0 0.0
    %309 = vmatpush2.xpose.msra.mxu0 0.0
    %310 = vmatprep.subr.mxu0 0.0
    %311 = vmatpush2.xpose.msra.mxu0 0.0
    %312 = vmatprep.subr.mxu0 0.0
    %313 = vmatpush2.xpose.msra.mxu0 0.0
    %314 = vmatprep.subr.mxu0 0.0
    %315 = vmatpush2.xpose.msra.mxu0 0.0
    %316 = vmatprep.subr.mxu0 0.0
    %317 = vmatpush2.xpose.msra.mxu0 0.0
    %318 = vmatprep.subr.mxu0 0.0
    %319 = vmatpush2.xpose.msra.mxu0 0.0
    %320 = vmatprep.subr.mxu0 0.0
    %321 = vmatpush2.xpose.msra.mxu0 0.0
    %322 = vmatprep.subr.mxu0 0.0
    %323 = vmatpush2.xpose.msra.mxu0 0.0
    %324 = vmatprep.subr.mxu0 0.0
    %325 = vmatpush2.xpose.msra.mxu0 0.0
    %326 = vmatprep.subr.mxu0 0.0
    %327 = vmatpush2.xpose.msra.mxu0 0.0
    %328 = vmatprep.subr.mxu0 0.0
    %329 = vmatpush2.xpose.msra.mxu0 0.0
    %330 = vmatprep.mubr.f32.mxu0 0.0
    %331 = vmatmul.mubr.f32.gmra.mxu0 %v159
    %v332 = vpop.f32.mrf.mxu0
    %v333 = vadd.f32 0.0, %v332
    %v334 = vpop.f32.mrf.mxu0
    %335 = vmatprep.mubr.f32.mxu0 0.0
    %336 = vmatmul.mubr.f32.gmra.mxu0 %v165
    %v337 = vpop.f32.mrf.mxu0
    %v338 = vadd.f32 0.0, %v337
    %v339 = vpop.f32.mrf.mxu0
    %340 = vdwg.mxu0
    %v341 = vmul.f32 %v333, 0.088388346
    %v342 = vmul.f32 %v338, 0.088388346
    %vm343 = vcmask 130048
    %v344 = vsel %vm343, %v341, -inf
    %345 = vmax.xlane.f32.xlu0 %v344
    %v346 = vpop.xlane.xlu0 %345
    %v347 = vsel %vm343, %v342, -inf
    %348 = vmax.xlane.f32.xlu0 %v347
    %v349 = vpop.xlane.xlu0 %348
    %v350 = vsub.f32 %v341, %v346
    %v351 = vsub.f32 %v342, %v349
    %v352 = vmul.f32 %v350, 1.442695
    %v353 = vpow.pop %v352
    %v354 = vmul.f32 %v351, 1.442695
    %v355 = vpow.pop %v354
    %v356 = vsel %vm343, %v353, 0.0
    %357 = vadd.xlane.f32.xlu0 %v356
    %v358 = vpop.xlane.xlu0 %357
    %v359 = vsel %vm343, %v355, 0.0
    %360 = vadd.xlane.f32.xlu0 %v359
    %v361 = vpop.xlane.xlu0 %360
    %v362 = vrcp.pop %v358
    %v363 = vmul.f32 %v353, %v362
    %v364 = vrcp.pop %v361
    %v365 = vmul.f32 %v355, %v364
    %v367 = vsel %vm343, %v363, 0
    %v370 = vsel %vm343, %v365, 0
    %372 = vmatprep.subr.mxu0 0.0
    %373 = vmatpush1.msra.mxu0 0.0
    %374 = vmatprep.subr.mxu0 0.0
    %375 = vmatpush1.msra.mxu0 0.0
    %376 = vmatprep.subr.mxu0 0.0
    %377 = vmatpush1.msra.mxu0 0.0
    %378 = vmatprep.subr.mxu0 0.0
    %379 = vmatpush1.msra.mxu0 0.0
    %380 = vmatprep.subr.mxu0 0.0
    %381 = vmatpush1.msra.mxu0 0.0
    %382 = vmatprep.subr.mxu0 0.0
    %383 = vmatpush1.msra.mxu0 0.0
    %384 = vmatprep.subr.mxu0 0.0
    %385 = vmatpush1.msra.mxu0 0.0
    %386 = vmatprep.subr.mxu0 0.0
    %387 = vmatpush1.msra.mxu0 0.0
    %388 = vmatprep.subr.mxu0 0.0
    %389 = vmatpush1.msra.mxu0 0.0
    %390 = vmatprep.subr.mxu0 0.0
    %391 = vmatpush1.msra.mxu0 0.0
    %392 = vmatprep.subr.mxu0 0.0
    %393 = vmatpush1.msra.mxu0 0.0
    %394 = vmatprep.subr.mxu0 0.0
    %395 = vmatpush1.msra.mxu0 0.0
    %396 = vmatprep.subr.mxu0 0.0
    %397 = vmatpush1.msra.mxu0 0.0
    %398 = vmatprep.subr.mxu0 0.0
    %399 = vmatpush1.msra.mxu0 0.0
    %400 = vmatprep.subr.mxu0 0.0
    %401 = vmatpush1.msra.mxu0 %v253
    %402 = vmatprep.subr.mxu0 0.0
    %403 = vmatpush1.msra.mxu0 %v248
    %404 = vmatprep.subr.mxu0 0.0
    %405 = vmatpush2.msra.mxu0 0.0
    %406 = vmatprep.subr.mxu0 0.0
    %407 = vmatpush2.msra.mxu0 0.0
    %408 = vmatprep.subr.mxu0 0.0
    %409 = vmatpush2.msra.mxu0 0.0
    %410 = vmatprep.subr.mxu0 0.0
    %411 = vmatpush2.msra.mxu0 0.0
    %412 = vmatprep.subr.mxu0 0.0
    %413 = vmatpush2.msra.mxu0 0.0
    %414 = vmatprep.subr.mxu0 0.0
    %415 = vmatpush2.msra.mxu0 0.0
    %416 = vmatprep.subr.mxu0 0.0
    %417 = vmatpush2.msra.mxu0 0.0
    %418 = vmatprep.subr.mxu0 0.0
    %419 = vmatpush2.msra.mxu0 0.0
    %420 = vmatprep.subr.mxu0 0.0
    %421 = vmatpush2.msra.mxu0 0.0
    %422 = vmatprep.subr.mxu0 0.0
    %423 = vmatpush2.msra.mxu0 0.0
    %424 = vmatprep.subr.mxu0 0.0
    %425 = vmatpush2.msra.mxu0 0.0
    %426 = vmatprep.subr.mxu0 0.0
    %427 = vmatpush2.msra.mxu0 0.0
    %428 = vmatprep.subr.mxu0 0.0
    %429 = vmatpush2.msra.mxu0 0.0
    %430 = vmatprep.subr.mxu0 0.0
    %431 = vmatpush2.msra.mxu0 0.0
    %432 = vmatprep.subr.mxu0 0.0
    %433 = vmatpush2.msra.mxu0 0.0
    %434 = vmatprep.subr.mxu0 0.0
    %435 = vmatpush2.msra.mxu0 0.0
    %436 = vmatprep.mubr.f32.mxu0 0.0
    %437 = vmatmul.mubr.f32.gmra.mxu0 %v367
    %v438 = vpop.f32.mrf.mxu0
    %v439 = vadd.f32 0.0, %v438
    %v440 = vpop.f32.mrf.mxu0
    %441 = vmatprep.mubr.f32.mxu0 0.0
    %442 = vmatmul.mubr.f32.gmra.mxu0 %v370
    %v443 = vpop.f32.mrf.mxu0
    %v444 = vadd.f32 0.0, %v443
    %v445 = vpop.f32.mrf.mxu0
    %446 = vdwg.mxu0
    %447 = vst [vmem:[#allocation7] sm:$0xff] %v439
    %448 = vst [vmem:[#allocation7 + $0x8] sm:$0xff] %v444
    %449 = vmatprep.subr.mxu0 0.0
    %450 = vmatpush1.xpose.msra.mxu0 0.0
    %451 = vmatprep.subr.mxu0 0.0
    %452 = vmatpush1.xpose.msra.mxu0 0.0
    %453 = vmatprep.subr.mxu0 0.0
    %454 = vmatpush1.xpose.msra.mxu0 0.0
    %455 = vmatprep.subr.mxu0 0.0
    %456 = vmatpush1.xpose.msra.mxu0 0.0
    %457 = vmatprep.subr.mxu0 0.0
    %458 = vmatpush1.xpose.msra.mxu0 0.0
    %459 = vmatprep.subr.mxu0 0.0
    %460 = vmatpush1.xpose.msra.mxu0 0.0
    %461 = vmatprep.subr.mxu0 0.0
    %462 = vmatpush1.xpose.msra.mxu0 0.0
    %463 = vmatprep.subr.mxu0 0.0
    %464 = vmatpush1.xpose.msra.mxu0 0.0
    %465 = vmatprep.subr.mxu0 0.0
    %466 = vmatpush1.xpose.msra.mxu0 0.0
    %467 = vmatprep.subr.mxu0 0.0
    %468 = vmatpush1.xpose.msra.mxu0 0.0
    %469 = vmatprep.subr.mxu0 0.0
    %470 = vmatpush1.xpose.msra.mxu0 0.0
    %471 = vmatprep.subr.mxu0 0.0
    %472 = vmatpush1.xpose.msra.mxu0 0.0
    %473 = vmatprep.subr.mxu0 0.0
    %474 = vmatpush1.xpose.msra.mxu0 0.0
    %475 = vmatprep.subr.mxu0 0.0
    %476 = vmatpush1.xpose.msra.mxu0 0.0
    %477 = vmatprep.subr.mxu0 0.0
    %478 = vmatpush1.xpose.msra.mxu0 %v179
    %479 = vmatprep.subr.mxu0 0.0
    %480 = vmatpush1.xpose.msra.mxu0 %v173
    %481 = vmatprep.subr.mxu0 0.0
    %482 = vmatpush2.xpose.msra.mxu0 0.0
    %483 = vmatprep.subr.mxu0 0.0
    %484 = vmatpush2.xpose.msra.mxu0 0.0
    %485 = vmatprep.subr.mxu0 0.0
    %486 = vmatpush2.xpose.msra.mxu0 0.0
    %487 = vmatprep.subr.mxu0 0.0
    %488 = vmatpush2.xpose.msra.mxu0 0.0
    %489 = vmatprep.subr.mxu0 0.0
    %490 = vmatpush2.xpose.msra.mxu0 0.0
    %491 = vmatprep.subr.mxu0 0.0
    %492 = vmatpush2.xpose.msra.mxu0 0.0
    %493 = vmatprep.subr.mxu0 0.0
    %494 = vmatpush2.xpose.msra.mxu0 0.0
    %495 = vmatprep.subr.mxu0 0.0
    %496 = vmatpush2.xpose.msra.mxu0 0.0
    %497 = vmatprep.subr.mxu0 0.0
    %498 = vmatpush2.xpose.msra.mxu0 0.0
    %499 = vmatprep.subr.mxu0 0.0
    %500 = vmatpush2.xpose.msra.mxu0 0.0
    %501 = vmatprep.subr.mxu0 0.0
    %502 = vmatpush2.xpose.msra.mxu0 0.0
    %503 = vmatprep.subr.mxu0 0.0
    %504 = vmatpush2.xpose.msra.mxu0 0.0
    %505 = vmatprep.subr.mxu0 0.0
    %506 = vmatpush2.xpose.msra.mxu0 0.0
    %507 = vmatprep.subr.mxu0 0.0
    %508 = vmatpush2.xpose.msra.mxu0 0.0
    %509 = vmatprep.subr.mxu0 0.0
    %510 = vmatpush2.xpose.msra.mxu0 0.0
    %511 = vmatprep.subr.mxu0 0.0
    %512 = vmatpush2.xpose.msra.mxu0 0.0
    %513 = vmatprep.mubr.f32.mxu0 0.0
    %514 = vmatmul.mubr.f32.gmra.mxu0 %v171
    %v515 = vpop.f32.mrf.mxu0
    %v516 = vadd.f32 0.0, %v515
    %v517 = vpop.f32.mrf.mxu0
    %518 = vmatprep.mubr.f32.mxu0 0.0
    %519 = vmatmul.mubr.f32.gmra.mxu0 %v177
    %v520 = vpop.f32.mrf.mxu0
    %v521 = vadd.f32 0.0, %v520
    %v522 = vpop.f32.mrf.mxu0
    %523 = vdwg.mxu0
    %v524 = vmul.f32 %v516, 0.088388346
    %v525 = vmul.f32 %v521, 0.088388346
    %v526 = vsel %vm343, %v524, -inf
    %527 = vmax.xlane.f32.xlu0 %v526
    %v528 = vpop.xlane.xlu0 %527
    %v529 = vsel %vm343, %v525, -inf
    %530 = vmax.xlane.f32.xlu0 %v529
    %v531 = vpop.xlane.xlu0 %530
    %v532 = vsub.f32 %v524, %v528
    %v533 = vsub.f32 %v525, %v531
    %v534 = vmul.f32 %v532, 1.442695
    %v535 = vpow.pop %v534
    %v536 = vmul.f32 %v533, 1.442695
    %v537 = vpow.pop %v536
    %v538 = vsel %vm343, %v535, 0.0
    %539 = vadd.xlane.f32.xlu0 %v538
    %v540 = vpop.xlane.xlu0 %539
    %v541 = vsel %vm343, %v537, 0.0
    %542 = vadd.xlane.f32.xlu0 %v541
    %v543 = vpop.xlane.xlu0 %542
    %v544 = vrcp.pop %v540
    %v545 = vmul.f32 %v535, %v544
    %v546 = vrcp.pop %v543
    %v547 = vmul.f32 %v537, %v546
    %v549 = vsel %vm343, %v545, 0
    %v552 = vsel %vm343, %v547, 0
    %554 = vmatprep.subr.mxu0 0.0
    %555 = vmatpush1.msra.mxu0 0.0
    %556 = vmatprep.subr.mxu0 0.0
    %557 = vmatpush1.msra.mxu0 0.0
    %558 = vmatprep.subr.mxu0 0.0
    %559 = vmatpush1.msra.mxu0 0.0
    %560 = vmatprep.subr.mxu0 0.0
    %561 = vmatpush1.msra.mxu0 0.0
    %562 = vmatprep.subr.mxu0 0.0
    %563 = vmatpush1.msra.mxu0 0.0
    %564 = vmatprep.subr.mxu0 0.0
    %565 = vmatpush1.msra.mxu0 0.0
    %566 = vmatprep.subr.mxu0 0.0
    %567 = vmatpush1.msra.mxu0 0.0
    %568 = vmatprep.subr.mxu0 0.0
    %569 = vmatpush1.msra.mxu0 0.0
    %570 = vmatprep.subr.mxu0 0.0
    %571 = vmatpush1.msra.mxu0 0.0
    %572 = vmatprep.subr.mxu0 0.0
    %573 = vmatpush1.msra.mxu0 0.0
    %574 = vmatprep.subr.mxu0 0.0
    %575 = vmatpush1.msra.mxu0 0.0
    %576 = vmatprep.subr.mxu0 0.0
    %577 = vmatpush1.msra.mxu0 0.0
    %578 = vmatprep.subr.mxu0 0.0
    %579 = vmatpush1.msra.mxu0 0.0
    %580 = vmatprep.subr.mxu0 0.0
    %581 = vmatpush1.msra.mxu0 0.0
    %582 = vmatprep.subr.mxu0 0.0
    %583 = vmatpush1.msra.mxu0 %v263
    %584 = vmatprep.subr.mxu0 0.0
    %585 = vmatpush1.msra.mxu0 %v258
    %586 = vmatprep.subr.mxu0 0.0
    %587 = vmatpush2.msra.mxu0 0.0
    %588 = vmatprep.subr.mxu0 0.0
    %589 = vmatpush2.msra.mxu0 0.0
    %590 = vmatprep.subr.mxu0 0.0
    %591 = vmatpush2.msra.mxu0 0.0
    %592 = vmatprep.subr.mxu0 0.0
    %593 = vmatpush2.msra.mxu0 0.0
    %594 = vmatprep.subr.mxu0 0.0
    %595 = vmatpush2.msra.mxu0 0.0
    %596 = vmatprep.subr.mxu0 0.0
    %597 = vmatpush2.msra.mxu0 0.0
    %598 = vmatprep.subr.mxu0 0.0
    %599 = vmatpush2.msra.mxu0 0.0
    %600 = vmatprep.subr.mxu0 0.0
    %601 = vmatpush2.msra.mxu0 0.0
    %602 = vmatprep.subr.mxu0 0.0
    %603 = vmatpush2.msra.mxu0 0.0
    %604 = vmatprep.subr.mxu0 0.0
    %605 = vmatpush2.msra.mxu0 0.0
    %606 = vmatprep.subr.mxu0 0.0
    %607 = vmatpush2.msra.mxu0 0.0
    %608 = vmatprep.subr.mxu0 0.0
    %609 = vmatpush2.msra.mxu0 0.0
    %610 = vmatprep.subr.mxu0 0.0
    %611 = vmatpush2.msra.mxu0 0.0
    %612 = vmatprep.subr.mxu0 0.0
    %613 = vmatpush2.msra.mxu0 0.0
    %614 = vmatprep.subr.mxu0 0.0
    %615 = vmatpush2.msra.mxu0 0.0
    %616 = vmatprep.subr.mxu0 0.0
    %617 = vmatpush2.msra.mxu0 0.0
    %618 = vmatprep.mubr.f32.mxu0 0.0
    %619 = vmatmul.mubr.f32.gmra.mxu0 %v549
    %v620 = vpop.f32.mrf.mxu0
    %v621 = vadd.f32 0.0, %v620
    %v622 = vpop.f32.mrf.mxu0
    %623 = vmatprep.mubr.f32.mxu0 0.0
    %624 = vmatmul.mubr.f32.gmra.mxu0 %v552
    %v625 = vpop.f32.mrf.mxu0
    %v626 = vadd.f32 0.0, %v625
    %v627 = vpop.f32.mrf.mxu0
    %628 = vdwg.mxu0
    %629 = vst [vmem:[#allocation7 + $0x10] sm:$0xff] %v621
    %630 = vst [vmem:[#allocation7 + $0x18] sm:$0xff] %v626
    // Predicated region
    $region18: #{attention_forward.1} parent=1 // pred_check
      _
    $region19: #{attention_forward.1} parent=1 // pred_check_branch
      %632 = sbr.rel (0) target = $region21
    $region20: #{attention_forward.1} parent=1 // pred_region
      %s634 = ssub.s32 512, 512
      %635 = vsyncadd [#allocation4], %s634
      %s636 = sshll.u32 [#allocation7], 4
      %s637 = int_to_ptr.vmem [resolvable:$true] %s636
      %642 = dma.vmem_to_hbm [thread:$0]  %s637, 512, %s2, [#allocation4], 128, 128, 8
    $region21: #{attention_forward.1} parent=1 // pred_fallthru
      _
    // Predicated region
    $region22: #{attention_forward.1} parent=1 // pred_check
      _
    $region23: #{attention_forward.1} parent=1 // pred_check_branch
      %644 = sbr.rel (0) target = $region25
    $region24: #{attention_forward.1} parent=1 // pred_region
      %645 = dma.done [#allocation4], 512
    $region25: #{attention_forward.1} parent=1 // pred_fallthru
      _
    %646 = vsyncpa [#allocation3], 1
    %647 = vsyncpa [#allocation6], 1
    %648 = vsyncpa [#allocation4], 1

</llo_original>
